<compile_context>
chip_gen: v5e
topology: v5e:2x2
jax: 0.10.0
libtpu: 0.0.40
codegen_flags: <defaults>
</compile_context>

<pallas_src>
import functools

import jax
import jax.numpy as jnp
from jax.experimental import pallas as pl
from jax.experimental.pallas import tpu as pltpu


def _add_prompt_kernel(x_ref, b_ref, o_ref):
    # x_ref / b_ref / o_ref: VMEM [TM, size] tiles of the current row block.
    # One vectorized whole-tile add + one unmasked whole-tile store.
    o_ref[...] = x_ref[...] + b_ref[...]


@functools.partial(jax.jit, static_argnames=("tm",))
def node_wise_prompt_ptb(x, b, *, tm=512):
    """Compute x + b with x, b: [N, size] (NodeWisePromptPtb.forward)."""
    assert x.shape == b.shape, "x and b must have identical [num_nodes, size] shapes"
    N, size = x.shape
    dtype_bytes = jnp.dtype(x.dtype).itemsize

    # Row tile: multiple of 8 (f32 sublane packing), capped by the padded N so
    # tiny inputs don't allocate an oversized block.
    n_pad8 = ((N + 7) // 8) * 8
    tm = max(8, min(tm, n_pad8))
    tm = ((tm + 7) // 8) * 8

    # Remainder handling: pad rows up to a multiple of TM, slice off at the end.
    n_padded = pl.cdiv(N, tm) * tm
    if n_padded != N:
        pad = n_padded - N
        x = jnp.pad(x, ((0, pad), (0, 0)))
        b = jnp.pad(b, ((0, pad), (0, 0)))

    grid = (n_padded // tm,)

    grid_spec = pl.GridSpec(
        grid=grid,
        in_specs=[
            pl.BlockSpec((tm, size), lambda i: (i, 0)),  # x row tile
            pl.BlockSpec((tm, size), lambda i: (i, 0)),  # b row tile
        ],
        out_specs=pl.BlockSpec((tm, size), lambda i: (i, 0)),
    )

    out = pl.pallas_call(
        _add_prompt_kernel,
        out_shape=jax.ShapeDtypeStruct((n_padded, size), x.dtype),
        grid_spec=grid_spec,
        compiler_params=pltpu.CompilerParams(
            dimension_semantics=("parallel",)),
        cost_estimate=pl.CostEstimate(
            flops=N * size,
            transcendentals=0,
            bytes_accessed=3 * N * size * dtype_bytes),
    )(x, b)

    if n_padded != N:
        out = out[:N]
    return out


if __name__ == "__main__":
    # Small shapes consistent with the module: size=300 feature dim (module
    # default), num_nodes=20 (deliberately NOT a multiple of the tile to
    # exercise the remainder path), uniform init interval (-0.1, 0.1).
    num_nodes = 20
    size = 300
    uniform_init_interval = (-0.1, 0.1)

    key = jax.random.PRNGKey(0)
    k_b, k_x = jax.random.split(key, 2)

    # Parameter init: nn.init.uniform_(b, lo, hi)
    b = jax.random.uniform(
        k_b, (num_nodes, size), dtype=jnp.float32,
        minval=uniform_init_interval[0], maxval=uniform_init_interval[1])

    x = jax.random.normal(k_x, (num_nodes, size), dtype=jnp.float32)

    out = node_wise_prompt_ptb(x, b)
    out = jax.block_until_ready(out)

    # Reference: x + b
    ref = x + b
    assert out.shape == ref.shape and out.dtype == ref.dtype
    assert jnp.allclose(out, ref, atol=1e-6, rtol=1e-6)

    print("KERNEL_OK")
</pallas_src>

<mosaic_0001>
module attributes {stable_mosaic.version = 11 : i64} {
  func.func @_add_prompt_kernel(%arg0: i32, %arg1: memref<24x300xf32, #tpu.memory_space<vmem>>, %arg2: memref<24x300xf32, #tpu.memory_space<vmem>>, %arg3: memref<24x300xf32, #tpu.memory_space<vmem>>) attributes {dimension_semantics = [#tpu.dimension_semantics<parallel>], iteration_bounds = array<i64: 1>, scalar_prefetch = 0 : i64, scratch_operands = 0 : i64, tpu.core_type = #tpu.core_type<tc>, window_params = [{transform_indices = @transform_0, window_bounds = array<i64: 24, 300>}, {transform_indices = @transform_1, window_bounds = array<i64: 24, 300>}, {transform_indices = @transform_2, window_bounds = array<i64: 24, 300>}]} {
    %c0 = arith.constant 0 : index
    %c0_0 = arith.constant 0 : index
    %0 = vector.load %arg1[%c0, %c0_0] : memref<24x300xf32, #tpu.memory_space<vmem>>, vector<24x300xf32>
    %c0_1 = arith.constant 0 : index
    %c0_2 = arith.constant 0 : index
    %1 = vector.load %arg2[%c0_1, %c0_2] : memref<24x300xf32, #tpu.memory_space<vmem>>, vector<24x300xf32>
    %2 = arith.addf %0, %1 : vector<24x300xf32>
    %c0_3 = arith.constant 0 : index
    %c0_4 = arith.constant 0 : index
    %3 = vector.load %arg3[%c0_3, %c0_4] : memref<24x300xf32, #tpu.memory_space<vmem>>, vector<24x300xf32>
    tpu.vector_store %arg3[%c0_3, %c0_4], %2 {strides = array<i32>} : memref<24x300xf32, #tpu.memory_space<vmem>>, vector<24x300xf32>,
    return
  }
  func.func @transform_0(%arg0: i32) -> (i32, i32) {
    %c0_i32 = arith.constant 0 : i32
    %c0_i32_0 = arith.constant 0 : i32
    return %arg0, %c0_i32 : i32, i32
  }
  func.func @transform_1(%arg0: i32) -> (i32, i32) {
    %c0_i32 = arith.constant 0 : i32
    %c0_i32_0 = arith.constant 0 : i32
    return %arg0, %c0_i32 : i32, i32
  }
  func.func @transform_2(%arg0: i32) -> (i32, i32) {
    %c0_i32 = arith.constant 0 : i32
    %c0_i32_0 = arith.constant 0 : i32
    return %arg0, %c0_i32 : i32, i32
  }
}

</mosaic_0001>

<llo_original>
// kernel: node_wise_prompt_ptb.1
$region0: #{node_wise_prompt_ptb.1}
  #allocation0 [shape = 'u32[]', space=smem, size = 0x4, offset = 0x4, fixed_abs, tag = 'smem constant byte address 0x4 - core index']
  #allocation1 [shape = 'u32[72,128]{1,0:T(1,128)}', space=vmem, size = 0x9000, scoped, tag = 'internal scratch']
  %s0 = inlined_call_operand.vmem [shape: f32[24,300], index: 0, kind: input, shape index: {}]
  %s1 = inlined_call_operand.vmem [shape: f32[24,300], index: 1, kind: input, shape index: {}]
  %s2 = inlined_call_operand.hbm [shape: f32[24,300], index: 2, kind: output, shape index: {}]
  %s3 = sld [smem:[#allocation0]]
  $region18: #{node_wise_prompt_ptb.1} parent=0
    _
  %s5 = ssub.s32 1, %s3
  %s6 = scalar_select 0, %s5, %s3
  $region1: #{node_wise_prompt_ptb.1} parent=0
    #allocation2 [shape = 'u8[36864]{0}', space=vmem, size = 0x9000, scoped, tag = 'output window, operand 0, single buffered']
    #allocation3 [shape = 's32[1]{0}', space=sflag, size = 0x4, scoped, tag = 'scoped memory for node_wise_prompt_ptb.1']
    %7 = vsyncpa [#allocation3], 0
    // Predicated region
    $region2: #{node_wise_prompt_ptb.1} parent=1 // pred_check
      _
    $region3: #{node_wise_prompt_ptb.1} parent=1 // pred_check_branch
      %9 = sbr.rel (0) target = $region5
    $region4: #{node_wise_prompt_ptb.1} parent=1 // pred_region
      _
    $region5: #{node_wise_prompt_ptb.1} parent=1 // pred_fallthru
      _
    // Predicated region
    $region6: #{node_wise_prompt_ptb.1} parent=1 // pred_check
      _
    $region7: #{node_wise_prompt_ptb.1} parent=1 // pred_check_branch
      %11 = sbr.rel (0) target = $region9
    $region8: #{node_wise_prompt_ptb.1} parent=1 // pred_region
      _
    $region9: #{node_wise_prompt_ptb.1} parent=1 // pred_fallthru
      _
    %v12 = vld [vmem:[%s0] sm:$0xff]
    %v13 = vld [vmem:[%s0 + $0x8] sm:$0xff]
    %v14 = vld [vmem:[%s0 + $0x10] sm:$0xff]
    %v15 = vld [vmem:[%s0 + $0x18] sm:$0xff]
    %v16 = vld [vmem:[%s0 + $0x20] sm:$0xff]
    %v17 = vld [vmem:[%s0 + $0x28] sm:$0xff]
    %v18 = vld [vmem:[%s0 + $0x30] sm:$0xff]
    %v19 = vld [vmem:[%s0 + $0x38] sm:$0xff]
    %v20 = vld [vmem:[%s0 + $0x40] sm:$0xff]
    %v21 = vld [vmem:[%s1] sm:$0xff]
    %v22 = vld [vmem:[%s1 + $0x8] sm:$0xff]
    %v23 = vld [vmem:[%s1 + $0x10] sm:$0xff]
    %v24 = vld [vmem:[%s1 + $0x18] sm:$0xff]
    %v25 = vld [vmem:[%s1 + $0x20] sm:$0xff]
    %v26 = vld [vmem:[%s1 + $0x28] sm:$0xff]
    %v27 = vld [vmem:[%s1 + $0x30] sm:$0xff]
    %v28 = vld [vmem:[%s1 + $0x38] sm:$0xff]
    %v29 = vld [vmem:[%s1 + $0x40] sm:$0xff]
    %v30 = vadd.f32 %v12, %v21
    %v31 = vadd.f32 %v13, %v22
    %v32 = vadd.f32 %v14, %v23
    %v33 = vadd.f32 %v15, %v24
    %v34 = vadd.f32 %v16, %v25
    %v35 = vadd.f32 %v17, %v26
    %v36 = vadd.f32 %v18, %v27
    %v37 = vadd.f32 %v19, %v28
    %v38 = vadd.f32 %v20, %v29
    %39 = vst [vmem:[#allocation2] sm:$0xff] %v30
    %40 = vst [vmem:[#allocation2 + $0x8] sm:$0xff] %v31
    %vm41 = vcmask 359424
    %42 = vst.msk [vmem:[#allocation2 + $0x10] sm:$0xff] %vm41, %v32
    %43 = vst [vmem:[#allocation2 + $0x18] sm:$0xff] %v33
    %44 = vst [vmem:[#allocation2 + $0x20] sm:$0xff] %v34
    %45 = vst.msk [vmem:[#allocation2 + $0x28] sm:$0xff] %vm41, %v35
    %46 = vst [vmem:[#allocation2 + $0x30] sm:$0xff] %v36
    %47 = vst [vmem:[#allocation2 + $0x38] sm:$0xff] %v37
    %48 = vst.msk [vmem:[#allocation2 + $0x40] sm:$0xff] %vm41, %v38
    // Predicated region
    $region10: #{node_wise_prompt_ptb.1} parent=1 // pred_check
      _
    $region11: #{node_wise_prompt_ptb.1} parent=1 // pred_check_branch
      %50 = sbr.rel (0) target = $region13
    $region12: #{node_wise_prompt_ptb.1} parent=1 // pred_region
      %52 = vsyncadd [#allocation3], 0
      %s53 = sshll.u32 [#allocation2], 4
      %s54 = int_to_ptr.vmem [resolvable:$true] %s53
      %s55 = sshll.u32 %s2, 4
      %s56 = int_to_ptr.hbm [resolvable:$true] %s55
      %61 = dma.vmem_to_hbm [thread:$0]  %s54, 1152, %s56, [#allocation3], 384, 384, 24
    $region13: #{node_wise_prompt_ptb.1} parent=1 // pred_fallthru
      _
    // Predicated region
    $region14: #{node_wise_prompt_ptb.1} parent=1 // pred_check
      _
    $region15: #{node_wise_prompt_ptb.1} parent=1 // pred_check_branch
      %63 = sbr.rel (0) target = $region17
    $region16: #{node_wise_prompt_ptb.1} parent=1 // pred_region
      %65 = dma.done [#allocation3], 1152
    $region17: #{node_wise_prompt_ptb.1} parent=1 // pred_fallthru
      _
    %66 = vsyncpa [#allocation3], 1

</llo_original>
